<compile_context>
chip_gen: v5e
topology: v5e:2x2
jax: 0.10.0
libtpu: 0.0.40
codegen_flags: <defaults>
</compile_context>

<pallas_src>
import math
from typing import NamedTuple

import jax
import jax.numpy as jnp
from jax.experimental import pallas as pl
from jax.experimental.pallas import tpu as pltpu


def _round_up(x, m):
    return ((x + m - 1) // m) * m


def _cdiv(a, b):
    return (a + b - 1) // b


def _vmem_budget_bytes():
    """Generation-aware VMEM budget with headroom for compiler scratch."""
    try:
        cap = int(pltpu.get_tpu_info().vmem_capacity_bytes)
        cap = min(cap, 128 * 1024 * 1024)
    except Exception:
        cap = 64 * 1024 * 1024          # conservative (v7x-sized) fallback
    return int(cap * 0.85)


# ----------------------------------------------------------------------------
# Kernels
# ----------------------------------------------------------------------------
def _ff_resident_kernel(x_ref, w1_ref, b1_ref, w2_ref, b2_ref, o_ref):
    """Whole FF for one row block; W1/W2 stay resident in VMEM."""
    h = jnp.dot(x_ref[...], w1_ref[...], preferred_element_type=jnp.float32)
    h = jnp.tanh(h + b1_ref[...])
    y = jnp.dot(h.astype(w2_ref.dtype), w2_ref[...],
                preferred_element_type=jnp.float32)
    o_ref[...] = (y + b2_ref[...]).astype(o_ref.dtype)


def _ff_reduce_kernel(x_ref, w1_ref, b1_ref, w2_ref, b2_ref, o_ref, acc_ref):
    """One (row block, d_ff chunk) reduction step with an f32 accumulator."""
    k = pl.program_id(1)

    @pl.when(k == 0)
    def _():
        acc_ref[...] = jnp.zeros_like(acc_ref)

    h = jnp.dot(x_ref[...], w1_ref[...], preferred_element_type=jnp.float32)
    h = jnp.tanh(h + b1_ref[...])
    acc_ref[...] += jnp.dot(h.astype(w2_ref.dtype), w2_ref[...],
                            preferred_element_type=jnp.float32)

    @pl.when(k == pl.num_programs(1) - 1)
    def _():
        o_ref[...] = (acc_ref[...] + b2_ref[...]).astype(o_ref.dtype)


# ----------------------------------------------------------------------------
# Parameter preparation (padding / casting hoisted out of the hot path)
# ----------------------------------------------------------------------------
class FFParams(NamedTuple):
    w1: jax.Array    # resident: (d_model_p, d_ff_p); reduce: (n_k, d_model_p, ff_tile)
    b1: jax.Array    # (1, d_ff_p) float32
    w2: jax.Array    # (d_ff_p, d_model_p) compute dtype
    b2: jax.Array    # (1, d_model_p) float32
    d_model: int
    d_ff: int
    d_model_p: int
    d_ff_p: int
    ff_tile: int     # == d_ff_p for the resident variant
    variant: str     # "resident" | "reduce"
    vmem_budget: int


def prepare_ff_params(w1, b1, w2, b2, *, compute_dtype=jnp.bfloat16,
                      force_variant=None):
    """Pad / cast / pre-block the weights once; reuse across calls."""
    d_model, d_ff = w1.shape
    assert w2.shape == (d_ff, d_model)

    cd = compute_dtype
    cd_bytes = jnp.dtype(cd).itemsize
    f32 = jnp.float32
    budget = _vmem_budget_bytes()

    d_model_p = _round_up(d_model, 128)
    d_ff_128 = _round_up(d_ff, 128)

    # Resident only if double-buffered padded weights leave plenty of room for
    # row blocks and the f32 intermediate activation.
    w_bytes = 2 * d_model_p * d_ff_128 * cd_bytes          # W1 + W2
    resident = 2 * w_bytes <= int(budget * 0.6)
    if force_variant is not None:
        resident = force_variant == "resident"

    if resident:
        ff_tile = d_ff_p = d_ff_128
        w1_p = jnp.zeros((d_model_p, d_ff_p), cd).at[:d_model, :d_ff].set(
            w1.astype(cd))
        variant = "resident"
    else:
        # Largest 128-multiple d_ff chunk whose double-buffered W1/W2 chunks
        # stay within ~40% of the VMEM budget.
        ff_tile = 128
        for cand in (1024, 512, 256, 128):
            if 4 * d_model_p * cand * cd_bytes <= int(budget * 0.4):
                ff_tile = cand
                break
        ff_tile = min(ff_tile, d_ff_128)
        d_ff_p = _round_up(d_ff, ff_tile)
        n_k = d_ff_p // ff_tile
        w1_full = jnp.zeros((d_model_p, d_ff_p), cd).at[:d_model, :d_ff].set(
            w1.astype(cd))
        # Pre-block so each W1 chunk DMA is one contiguous HBM region.
        w1_p = w1_full.reshape(d_model_p, n_k, ff_tile).transpose(1, 0, 2)
        variant = "reduce"

    w2_p = jnp.zeros((d_ff_p, d_model_p), cd).at[:d_ff, :d_model].set(
        w2.astype(cd))
    b1_p = jnp.zeros((1, d_ff_p), f32).at[0, :d_ff].set(b1.astype(f32))
    b2_p = jnp.zeros((1, d_model_p), f32).at[0, :d_model].set(b2.astype(f32))

    return FFParams(w1_p, b1_p, w2_p, b2_p, d_model, d_ff, d_model_p, d_ff_p,
                    ff_tile, variant, budget)


def _pick_row_tile(requested, m, budget_rows):
    """8-aligned row tile within the VMEM row budget, preferring 256-aligned
    tiles and >= 2 row blocks (2-TC chips / megacore) for larger inputs."""
    budget_rows = max(8, (budget_rows // 8) * 8)
    m8 = _round_up(m, 8)
    if m8 <= 256:
        return min(m8, budget_rows)
    tile = min(requested, 1024, budget_rows)
    tile = min(tile, _round_up(_cdiv(m8, 2), 256))     # >= 2 row blocks
    if tile >= 256:
        tile = (tile // 256) * 256                     # 256x256 MXU alignment
    else:
        tile = max(8, (tile // 8) * 8)
    return tile


# ----------------------------------------------------------------------------
# Forward pass
# ----------------------------------------------------------------------------
def position_wise_ff(x, params: FFParams, *, row_tile=1024):
    """x: (..., d_model) -> (..., d_model), y = tanh(x@W1+b1)@W2 + b2."""
    orig_shape = x.shape
    out_dtype = x.dtype
    d_model = params.d_model
    d_model_p = params.d_model_p
    d_ff_p = params.d_ff_p
    ff_tile = params.ff_tile
    cd = params.w2.dtype
    cd_bytes = jnp.dtype(cd).itemsize
    out_bytes = jnp.dtype(out_dtype).itemsize

    x2d = x.reshape(-1, d_model)
    m = x2d.shape[0]

    # VMEM-budget-driven row tile (accounts for double buffers, f32
    # intermediates and the accumulator scratch).
    bias_bytes = (params.b1.size + params.b2.size) * 4 * 2
    if params.variant == "resident":
        fixed = 2 * (params.w1.size + params.w2.size) * cd_bytes + bias_bytes
        per_row = (d_model_p * cd_bytes * 2      # x block (double-buffered)
                   + d_model_p * out_bytes * 2   # out block (double-buffered)
                   + d_ff_p * 4)                 # f32 intermediate h
    else:
        fixed = 4 * d_model_p * ff_tile * cd_bytes + bias_bytes
        per_row = (d_model_p * cd_bytes * 2
                   + d_model_p * out_bytes * 2
                   + d_model_p * 4               # f32 accumulator scratch
                   + ff_tile * 4)                # f32 intermediate h chunk
    budget_rows = max(8, (params.vmem_budget - fixed) // per_row)
    rt = _pick_row_tile(row_tile, m, budget_rows)
    m_p = _round_up(m, rt)

    # Pad / cast x only when actually needed (no-copy fast path otherwise).
    x_in = x2d if x2d.dtype == cd else x2d.astype(cd)
    if m_p != m or d_model_p != d_model:
        x_in = jnp.pad(x_in, ((0, m_p - m), (0, d_model_p - d_model)))

    if params.variant == "resident":
        grid = (m_p // rt,)
        in_specs = [
            pl.BlockSpec((rt, d_model_p), lambda i: (i, 0)),          # x rows
            pl.BlockSpec((d_model_p, d_ff_p), lambda i: (0, 0)),      # W1 (resident)
            pl.BlockSpec((1, d_ff_p), lambda i: (0, 0)),              # b1
            pl.BlockSpec((d_ff_p, d_model_p), lambda i: (0, 0)),      # W2 (resident)
            pl.BlockSpec((1, d_model_p), lambda i: (0, 0)),           # b2
        ]
        out_specs = pl.BlockSpec((rt, d_model_p), lambda i: (i, 0))
        scratch = []
        kernel = _ff_resident_kernel
        dims = ("parallel",)
    else:
        grid = (m_p // rt, d_ff_p // ff_tile)
        in_specs = [
            pl.BlockSpec((rt, d_model_p), lambda i, k: (i, 0)),               # x rows
            pl.BlockSpec((None, d_model_p, ff_tile), lambda i, k: (k, 0, 0)),  # W1 chunk
            pl.BlockSpec((1, ff_tile), lambda i, k: (0, k)),                  # b1 chunk
            pl.BlockSpec((ff_tile, d_model_p), lambda i, k: (k, 0)),          # W2 chunk
            pl.BlockSpec((1, d_model_p), lambda i, k: (0, 0)),                # b2
        ]
        out_specs = pl.BlockSpec((rt, d_model_p), lambda i, k: (i, 0))
        scratch = [pltpu.VMEM((rt, d_model_p), jnp.float32)]
        kernel = _ff_reduce_kernel
        dims = ("parallel", "arbitrary")

    out = pl.pallas_call(
        kernel,
        out_shape=jax.ShapeDtypeStruct((m_p, d_model_p), out_dtype),
        grid_spec=pltpu.PrefetchScalarGridSpec(
            num_scalar_prefetch=0,
            grid=grid,
            in_specs=in_specs,
            out_specs=out_specs,
            scratch_shapes=scratch,
        ),
        compiler_params=pltpu.CompilerParams(
            dimension_semantics=dims,
            vmem_limit_bytes=params.vmem_budget,
        ),
    )(x_in, params.w1, params.b1, params.w2, params.b2)

    if m_p != m or d_model_p != d_model:
        out = out[:m, :d_model]
    return out.reshape(orig_shape)


def position_wise_ff_raw(x, w1, b1, w2, b2, *, compute_dtype=jnp.bfloat16,
                         force_variant=None, row_tile=1024):
    """Convenience wrapper that prepares parameters on the fly.  For repeated
    calls prefer prepare_ff_params(...) once + position_wise_ff(x, params)."""
    params = prepare_ff_params(w1, b1, w2, b2, compute_dtype=compute_dtype,
                               force_variant=force_variant)
    return position_wise_ff(x, params, row_tile=row_tile)


def init_params(key, d_model, d_ff, dtype=jnp.float32):
    """Mirror PyTorch nn.Linear init: uniform(-1/sqrt(fan_in), +1/sqrt(fan_in)).

    Weights are stored pre-transposed vs. PyTorch's (out, in) layout so the
    kernel performs plain x @ W matmuls.
    """
    k1, k2, k3, k4 = jax.random.split(key, 4)
    bound1 = 1.0 / math.sqrt(d_model)
    bound2 = 1.0 / math.sqrt(d_ff)
    w1 = jax.random.uniform(k1, (d_model, d_ff), dtype, -bound1, bound1)
    b1 = jax.random.uniform(k2, (d_ff,), dtype, -bound1, bound1)
    w2 = jax.random.uniform(k3, (d_ff, d_model), dtype, -bound2, bound2)
    b2 = jax.random.uniform(k4, (d_model,), dtype, -bound2, bound2)
    return w1, b1, w2, b2


if __name__ == "__main__":
    batch, seq, d_model, d_ff = 2, 8, 32, 64

    key = jax.random.PRNGKey(0)
    kx, kp = jax.random.split(key)
    x = jax.random.normal(kx, (batch, seq, d_model), jnp.float32)
    w1, b1, w2, b2 = init_params(kp, d_model, d_ff)

    ref = jnp.tanh(x @ w1 + b1) @ w2 + b2

    # 1) Exact-semantics path (f32 MXU inputs, resident weights) -- tight tol.
    p32 = prepare_ff_params(w1, b1, w2, b2, compute_dtype=jnp.float32)
    y32 = jax.block_until_ready(position_wise_ff(x, p32))
    assert y32.shape == x.shape
    assert jnp.allclose(y32, ref, atol=1e-5, rtol=1e-5)

    # 2) Fast path (bf16 MXU inputs, f32 accumulation) -- bf16-level tolerance.
    pbf = prepare_ff_params(w1, b1, w2, b2, compute_dtype=jnp.bfloat16)
    ybf = jax.block_until_ready(position_wise_ff(x, pbf))
    assert ybf.shape == x.shape
    assert jnp.allclose(ybf, ref, atol=5e-2, rtol=5e-2)

    # 3) Coverage of the d_ff-reduction variant (used when weights exceed VMEM).
    prd = prepare_ff_params(w1, b1, w2, b2, compute_dtype=jnp.float32,
                            force_variant="reduce")
    yrd = jax.block_until_ready(position_wise_ff(x, prd))
    assert yrd.shape == x.shape
    assert jnp.allclose(yrd, ref, atol=1e-5, rtol=1e-5)

    print("KERNEL_OK")
</pallas_src>

<mosaic_0001>
module attributes {stable_mosaic.version = 11 : i64} {
  func.func @_ff_resident_kernel(%arg0: i32, %arg1: memref<16x128xf32, #tpu.memory_space<vmem>>, %arg2: memref<128x128xf32, #tpu.memory_space<vmem>>, %arg3: memref<1x128xf32, #tpu.memory_space<vmem>>, %arg4: memref<128x128xf32, #tpu.memory_space<vmem>>, %arg5: memref<1x128xf32, #tpu.memory_space<vmem>>, %arg6: memref<16x128xf32, #tpu.memory_space<vmem>>) attributes {dimension_semantics = [#tpu.dimension_semantics<parallel>], iteration_bounds = array<i64: 1>, scalar_prefetch = 0 : i64, scratch_operands = 0 : i64, tpu.core_type = #tpu.core_type<tc>, window_params = [{transform_indices = @transform_0, window_bounds = array<i64: 16, 128>}, {pipeline_mode = #tpu.pipeline_mode<synchronous>, transform_indices = @transform_1, window_bounds = array<i64: 128, 128>}, {pipeline_mode = #tpu.pipeline_mode<synchronous>, transform_indices = @transform_2, window_bounds = array<i64: 1, 128>}, {pipeline_mode = #tpu.pipeline_mode<synchronous>, transform_indices = @transform_3, window_bounds = array<i64: 128, 128>}, {pipeline_mode = #tpu.pipeline_mode<synchronous>, transform_indices = @transform_4, window_bounds = array<i64: 1, 128>}, {transform_indices = @transform_5, window_bounds = array<i64: 16, 128>}]} {
    %c0 = arith.constant 0 : index
    %c0_0 = arith.constant 0 : index
    %0 = vector.load %arg1[%c0, %c0_0] : memref<16x128xf32, #tpu.memory_space<vmem>>, vector<16x128xf32>
    %c0_1 = arith.constant 0 : index
    %c0_2 = arith.constant 0 : index
    %1 = vector.load %arg2[%c0_1, %c0_2] : memref<128x128xf32, #tpu.memory_space<vmem>>, vector<128x128xf32>
    %cst = arith.constant dense<0.000000e+00> : vector<16x128xf32>
    %2 = tpu.matmul %0, %1, %cst {dimension_numbers = #tpu.dot_dimension_numbers<[1], [0], [0], [1], [0, 0, 1, 1], [], []>} : vector<16x128xf32>, vector<128x128xf32>, vector<16x128xf32> -> vector<16x128xf32>
    %c0_3 = arith.constant 0 : index
    %c0_4 = arith.constant 0 : index
    %3 = vector.load %arg3[%c0_3, %c0_4] : memref<1x128xf32, #tpu.memory_space<vmem>>, vector<1x128xf32>
    %4 = vector.broadcast %3 : vector<1x128xf32> to vector<16x128xf32>
    %5 = arith.addf %2, %4 : vector<16x128xf32>
    %6 = math.tanh %5 : vector<16x128xf32>
    %c0_5 = arith.constant 0 : index
    %c0_6 = arith.constant 0 : index
    %7 = vector.load %arg4[%c0_5, %c0_6] : memref<128x128xf32, #tpu.memory_space<vmem>>, vector<128x128xf32>
    %cst_7 = arith.constant dense<0.000000e+00> : vector<16x128xf32>
    %8 = tpu.matmul %6, %7, %cst_7 {dimension_numbers = #tpu.dot_dimension_numbers<[1], [0], [0], [1], [0, 0, 1, 1], [], []>} : vector<16x128xf32>, vector<128x128xf32>, vector<16x128xf32> -> vector<16x128xf32>
    %c0_8 = arith.constant 0 : index
    %c0_9 = arith.constant 0 : index
    %9 = vector.load %arg5[%c0_8, %c0_9] : memref<1x128xf32, #tpu.memory_space<vmem>>, vector<1x128xf32>
    %10 = vector.broadcast %9 : vector<1x128xf32> to vector<16x128xf32>
    %11 = arith.addf %8, %10 : vector<16x128xf32>
    %c0_10 = arith.constant 0 : index
    %c0_11 = arith.constant 0 : index
    %12 = vector.load %arg6[%c0_10, %c0_11] : memref<16x128xf32, #tpu.memory_space<vmem>>, vector<16x128xf32>
    tpu.vector_store %arg6[%c0_10, %c0_11], %11 {strides = array<i32>} : memref<16x128xf32, #tpu.memory_space<vmem>>, vector<16x128xf32>,
    return
  }
  func.func @transform_0(%arg0: i32) -> (i32, i32) {
    %c0_i32 = arith.constant 0 : i32
    %c0_i32_0 = arith.constant 0 : i32
    return %arg0, %c0_i32 : i32, i32
  }
  func.func @transform_1(%arg0: i32) -> (i32, i32) {
    %c0_i32 = arith.constant 0 : i32
    %c0_i32_0 = arith.constant 0 : i32
    %c0_i32_1 = arith.constant 0 : i32
    return %c0_i32, %c0_i32_0 : i32, i32
  }
  func.func @transform_2(%arg0: i32) -> (i32, i32) {
    %c0_i32 = arith.constant 0 : i32
    %c0_i32_0 = arith.constant 0 : i32
    %c0_i32_1 = arith.constant 0 : i32
    return %c0_i32, %c0_i32_0 : i32, i32
  }
  func.func @transform_3(%arg0: i32) -> (i32, i32) {
    %c0_i32 = arith.constant 0 : i32
    %c0_i32_0 = arith.constant 0 : i32
    %c0_i32_1 = arith.constant 0 : i32
    return %c0_i32, %c0_i32_0 : i32, i32
  }
  func.func @transform_4(%arg0: i32) -> (i32, i32) {
    %c0_i32 = arith.constant 0 : i32
    %c0_i32_0 = arith.constant 0 : i32
    %c0_i32_1 = arith.constant 0 : i32
    return %c0_i32, %c0_i32_0 : i32, i32
  }
  func.func @transform_5(%arg0: i32) -> (i32, i32) {
    %c0_i32 = arith.constant 0 : i32
    %c0_i32_0 = arith.constant 0 : i32
    return %arg0, %c0_i32 : i32, i32
  }
}

</mosaic_0001>

<llo_original>
// kernel: tpu_custom_call.1
$region0: #{tpu_custom_call.1}
  #allocation0 [shape = 'u32[]', space=smem, size = 0x4, offset = 0x4, fixed_abs, tag = 'smem constant byte address 0x4 - core index']
  #allocation1 [shape = 'u32[72,128]{1,0:T(1,128)}', space=vmem, size = 0x9000, scoped, tag = 'internal scratch']
  %s0 = inlined_call_operand.hbm [shape: f32[16,128], index: 0, kind: input, shape index: {}]
  %s1 = inlined_call_operand.hbm [shape: f32[128,128], index: 1, kind: input, shape index: {}]
  %s2 = inlined_call_operand.vmem [shape: f32[1,128], index: 2, kind: input, shape index: {}]
  %s3 = inlined_call_operand.hbm [shape: f32[128,128], index: 3, kind: input, shape index: {}]
  %s4 = inlined_call_operand.vmem [shape: f32[1,128], index: 4, kind: input, shape index: {}]
  %s5 = inlined_call_operand.hbm [shape: f32[16,128], index: 5, kind: output, shape index: {}]
  %s6 = sld [smem:[#allocation0]]
  $region42: #{tpu_custom_call.1} parent=0
    _
  %s8 = ssub.s32 1, %s6
  %s9 = scalar_select 0, %s8, %s6
  $region1: #{tpu_custom_call.1} parent=0
    #allocation2 [shape = 'u8[8192]{0}', space=vmem, size = 0x2000, scoped, tag = 'input window, operand 0, single buffered']
    #allocation3 [shape = 's32[1]{0}', space=sflag, size = 0x4, scoped, tag = 'scoped memory for tpu_custom_call.1']
    #allocation4 [shape = 's32[1]{0}', space=sflag, size = 0x4, scoped, tag = 'scoped memory for tpu_custom_call.1']
    #allocation5 [shape = 'u8[65536]{0}', space=vmem, size = 0x10000, scoped, tag = 'input window, operand 1, single buffered']
    #allocation6 [shape = 's32[1]{0}', space=sflag, size = 0x4, scoped, tag = 'scoped memory for tpu_custom_call.1']
    #allocation7 [shape = 'u8[65536]{0}', space=vmem, size = 0x10000, scoped, tag = 'input window, operand 3, single buffered']
    #allocation8 [shape = 'u8[8192]{0}', space=vmem, size = 0x2000, scoped, tag = 'output window, operand 0, single buffered']
    %10 = vsyncpa [#allocation3], 0
    %11 = vsyncpa [#allocation6], 0
    %12 = vsyncpa [#allocation4], 0
    // Predicated region
    $region2: #{tpu_custom_call.1} parent=1 // pred_check
      _
    $region3: #{tpu_custom_call.1} parent=1 // pred_check_branch
      %14 = sbr.rel (0) target = $region5
    $region4: #{tpu_custom_call.1} parent=1 // pred_region
      %16 = vsyncadd [#allocation3], 0
      %s17 = sshll.u32 %s0, 4
      %s18 = int_to_ptr.hbm [resolvable:$true] %s17
      %s19 = sshll.u32 [#allocation2], 4
      %s20 = int_to_ptr.vmem [resolvable:$true] %s19
      %25 = dma.hbm_to_vmem [thread:$0]  %s18, 256, %s20, [#allocation3], 128, 128, 8
    $region5: #{tpu_custom_call.1} parent=1 // pred_fallthru
      _
    // Predicated region
    $region6: #{tpu_custom_call.1} parent=1 // pred_check
      _
    $region7: #{tpu_custom_call.1} parent=1 // pred_check_branch
      %27 = sbr.rel (0) target = $region9
    $region8: #{tpu_custom_call.1} parent=1 // pred_region
      %29 = vsyncadd [#allocation6], 0
      %s30 = sshll.u32 %s1, 4
      %s31 = int_to_ptr.hbm [resolvable:$true] %s30
      %s32 = sshll.u32 [#allocation5], 4
      %s33 = int_to_ptr.vmem [resolvable:$true] %s32
      %38 = dma.hbm_to_vmem [thread:$0]  %s31, 2048, %s33, [#allocation6], 128, 128, 8
    $region9: #{tpu_custom_call.1} parent=1 // pred_fallthru
      _
    // Predicated region
    $region10: #{tpu_custom_call.1} parent=1 // pred_check
      _
    $region11: #{tpu_custom_call.1} parent=1 // pred_check_branch
      %40 = sbr.rel (0) target = $region13
    $region12: #{tpu_custom_call.1} parent=1 // pred_region
      _
    $region13: #{tpu_custom_call.1} parent=1 // pred_fallthru
      _
    // Predicated region
    $region14: #{tpu_custom_call.1} parent=1 // pred_check
      _
    $region15: #{tpu_custom_call.1} parent=1 // pred_check_branch
      %42 = sbr.rel (0) target = $region17
    $region16: #{tpu_custom_call.1} parent=1 // pred_region
      %44 = vsyncadd [#allocation6], 0
      %s45 = sshll.u32 %s3, 4
      %s46 = int_to_ptr.hbm [resolvable:$true] %s45
      %s47 = sshll.u32 [#allocation7], 4
      %s48 = int_to_ptr.vmem [resolvable:$true] %s47
      %53 = dma.hbm_to_vmem [thread:$0]  %s46, 2048, %s48, [#allocation6], 128, 128, 8
    $region17: #{tpu_custom_call.1} parent=1 // pred_fallthru
      _
    // Predicated region
    $region18: #{tpu_custom_call.1} parent=1 // pred_check
      _
    $region19: #{tpu_custom_call.1} parent=1 // pred_check_branch
      %55 = sbr.rel (0) target = $region21
    $region20: #{tpu_custom_call.1} parent=1 // pred_region
      _
    $region21: #{tpu_custom_call.1} parent=1 // pred_fallthru
      _
    // Predicated region
    $region22: #{tpu_custom_call.1} parent=1 // pred_check
      _
    $region23: #{tpu_custom_call.1} parent=1 // pred_check_branch
      %57 = sbr.rel (0) target = $region25
    $region24: #{tpu_custom_call.1} parent=1 // pred_region
      %59 = dma.done [#allocation3], 256
    $region25: #{tpu_custom_call.1} parent=1 // pred_fallthru
      _
    // Predicated region
    $region26: #{tpu_custom_call.1} parent=1 // pred_check
      _
    $region27: #{tpu_custom_call.1} parent=1 // pred_check_branch
      %61 = sbr.rel (0) target = $region29
    $region28: #{tpu_custom_call.1} parent=1 // pred_region
      %63 = dma.done [#allocation6], 2048
    $region29: #{tpu_custom_call.1} parent=1 // pred_fallthru
      _
    // Predicated region
    $region30: #{tpu_custom_call.1} parent=1 // pred_check
      _
    $region31: #{tpu_custom_call.1} parent=1 // pred_check_branch
      %65 = sbr.rel (0) target = $region33
    $region32: #{tpu_custom_call.1} parent=1 // pred_region
      %67 = dma.done [#allocation6], 2048
    $region33: #{tpu_custom_call.1} parent=1 // pred_fallthru
      _
    %v68 = vld [vmem:[#allocation2] sm:$0xff]
    %v69 = vld [vmem:[#allocation2 + $0x8] sm:$0xff]
    %v70 = vld [vmem:[#allocation5] sm:$0xff]
    %v71 = vld [vmem:[#allocation5 + $0x8] sm:$0xff]
    %v72 = vld [vmem:[#allocation5 + $0x10] sm:$0xff]
    %v73 = vld [vmem:[#allocation5 + $0x18] sm:$0xff]
    %v74 = vld [vmem:[#allocation5 + $0x20] sm:$0xff]
    %v75 = vld [vmem:[#allocation5 + $0x28] sm:$0xff]
    %v76 = vld [vmem:[#allocation5 + $0x30] sm:$0xff]
    %v77 = vld [vmem:[#allocation5 + $0x38] sm:$0xff]
    %v78 = vld [vmem:[#allocation5 + $0x40] sm:$0xff]
    %v79 = vld [vmem:[#allocation5 + $0x48] sm:$0xff]
    %v80 = vld [vmem:[#allocation5 + $0x50] sm:$0xff]
    %v81 = vld [vmem:[#allocation5 + $0x58] sm:$0xff]
    %v82 = vld [vmem:[#allocation5 + $0x60] sm:$0xff]
    %v83 = vld [vmem:[#allocation5 + $0x68] sm:$0xff]
    %v84 = vld [vmem:[#allocation5 + $0x70] sm:$0xff]
    %v85 = vld [vmem:[#allocation5 + $0x78] sm:$0xff]
    %v86 = vld [vmem:[%s2] sm:$0x1]
    %v88 = vperm.slane %v86, 0
    %90 = vmatpush.msra.mxu0 %v85
    %91 = vmatpush.msra.mxu0 %v84
    %92 = vmatpush.msra.mxu0 %v83
    %93 = vmatpush.msra.mxu0 %v82
    %94 = vmatpush.msra.mxu0 %v81
    %95 = vmatpush.msra.mxu0 %v80
    %96 = vmatpush.msra.mxu0 %v79
    %97 = vmatpush.msra.mxu0 %v78
    %98 = vmatpush.msra.mxu0 %v77
    %99 = vmatpush.msra.mxu0 %v76
    %100 = vmatpush.msra.mxu0 %v75
    %101 = vmatpush.msra.mxu0 %v74
    %102 = vmatpush.msra.mxu0 %v73
    %103 = vmatpush.msra.mxu0 %v72
    %104 = vmatpush.msra.mxu0 %v71
    %105 = vmatpush.msra.mxu0 %v70
    %106 = vmatmul.f32.gmra.mxu0 %v68
    %v107 = vpop.f32.mrf.mxu0
    %v108 = vadd.f32 %v88, %v107
    %109 = vmatmul.f32.gmra.mxu0 %v69
    %v110 = vpop.f32.mrf.mxu0
    %v111 = vadd.f32 %v88, %v110
    %112 = vdwg.mxu0
    %v113 = vtanh.pop %v108
    %v114 = vtanh.pop %v111
    %v115 = vld [vmem:[#allocation7] sm:$0xff]
    %v116 = vld [vmem:[#allocation7 + $0x8] sm:$0xff]
    %v117 = vld [vmem:[#allocation7 + $0x10] sm:$0xff]
    %v118 = vld [vmem:[#allocation7 + $0x18] sm:$0xff]
    %v119 = vld [vmem:[#allocation7 + $0x20] sm:$0xff]
    %v120 = vld [vmem:[#allocation7 + $0x28] sm:$0xff]
    %v121 = vld [vmem:[#allocation7 + $0x30] sm:$0xff]
    %v122 = vld [vmem:[#allocation7 + $0x38] sm:$0xff]
    %v123 = vld [vmem:[#allocation7 + $0x40] sm:$0xff]
    %v124 = vld [vmem:[#allocation7 + $0x48] sm:$0xff]
    %v125 = vld [vmem:[#allocation7 + $0x50] sm:$0xff]
    %v126 = vld [vmem:[#allocation7 + $0x58] sm:$0xff]
    %v127 = vld [vmem:[#allocation7 + $0x60] sm:$0xff]
    %v128 = vld [vmem:[#allocation7 + $0x68] sm:$0xff]
    %v129 = vld [vmem:[#allocation7 + $0x70] sm:$0xff]
    %v130 = vld [vmem:[#allocation7 + $0x78] sm:$0xff]
    %v131 = vld [vmem:[%s4] sm:$0x1]
    %v133 = vperm.slane %v131, 0
    %135 = vmatpush.msra.mxu0 %v130
    %136 = vmatpush.msra.mxu0 %v129
    %137 = vmatpush.msra.mxu0 %v128
    %138 = vmatpush.msra.mxu0 %v127
    %139 = vmatpush.msra.mxu0 %v126
    %140 = vmatpush.msra.mxu0 %v125
    %141 = vmatpush.msra.mxu0 %v124
    %142 = vmatpush.msra.mxu0 %v123
    %143 = vmatpush.msra.mxu0 %v122
    %144 = vmatpush.msra.mxu0 %v121
    %145 = vmatpush.msra.mxu0 %v120
    %146 = vmatpush.msra.mxu0 %v119
    %147 = vmatpush.msra.mxu0 %v118
    %148 = vmatpush.msra.mxu0 %v117
    %149 = vmatpush.msra.mxu0 %v116
    %150 = vmatpush.msra.mxu0 %v115
    %151 = vmatmul.f32.gmra.mxu0 %v113
    %v152 = vpop.f32.mrf.mxu0
    %v153 = vadd.f32 %v133, %v152
    %154 = vmatmul.f32.gmra.mxu0 %v114
    %v155 = vpop.f32.mrf.mxu0
    %v156 = vadd.f32 %v133, %v155
    %157 = vdwg.mxu0
    %158 = vst [vmem:[#allocation8] sm:$0xff] %v153
    %159 = vst [vmem:[#allocation8 + $0x8] sm:$0xff] %v156
    // Predicated region
    $region34: #{tpu_custom_call.1} parent=1 // pred_check
      _
    $region35: #{tpu_custom_call.1} parent=1 // pred_check_branch
      %161 = sbr.rel (0) target = $region37
    $region36: #{tpu_custom_call.1} parent=1 // pred_region
      %163 = vsyncadd [#allocation4], 0
      %s164 = sshll.u32 [#allocation8], 4
      %s165 = int_to_ptr.vmem [resolvable:$true] %s164
      %s166 = sshll.u32 %s5, 4
      %s167 = int_to_ptr.hbm [resolvable:$true] %s166
      %172 = dma.vmem_to_hbm [thread:$0]  %s165, 256, %s167, [#allocation4], 128, 128, 8
    $region37: #{tpu_custom_call.1} parent=1 // pred_fallthru
      _
    // Predicated region
    $region38: #{tpu_custom_call.1} parent=1 // pred_check
      _
    $region39: #{tpu_custom_call.1} parent=1 // pred_check_branch
      %174 = sbr.rel (0) target = $region41
    $region40: #{tpu_custom_call.1} parent=1 // pred_region
      %176 = dma.done [#allocation4], 256
    $region41: #{tpu_custom_call.1} parent=1 // pred_fallthru
      _
    %177 = vsyncpa [#allocation3], 1
    %178 = vsyncpa [#allocation6], 1
    %179 = vsyncpa [#allocation4], 1

</llo_original>
